<compile_context>
chip_gen: v6e
topology: v6e:2x2x1
jax: 0.10.0
libtpu: 0.0.40
codegen_flags: <defaults>
</compile_context>

<pallas_src>
import jax
import jax.numpy as jnp
from jax.experimental import pallas as pl
from jax.experimental.pallas import tpu as pltpu


def _tlstm_seq_kernel(xw_ref, t_ref, h0_ref, c0_ref,
                      u_ref, wd_w_ref, wd_b_ref,
                      h_out_ref, c_out_ref,
                      h_scr, c_scr):
    """One grid step == one TLSTM cell step. h/c live in VMEM scratch."""
    H = c0_ref.shape[1]
    step = pl.program_id(0)

    # Initialize the recurrent state from the kernel inputs on the first step.
    @pl.when(step == 0)
    def _():
        h_scr[...] = h0_ref[...]
        c_scr[...] = c0_ref[...]

    h = h_scr[...]                       # (B, H) f32
    c = c_scr[...]                       # (B, H) f32
    t = t_ref[...]                       # (B, 1) f32, elapsed-time factor

    # --- short-term memory discount: c_st = tanh(W_d(c)) ---------------------
    c_st = jnp.tanh(
        jnp.dot(c, wd_w_ref[...], preferred_element_type=jnp.float32)
        + wd_b_ref[...]
    )
    c_adj = c - c_st + c_st * t          # exact original formula

    # --- gates: precomputed (x @ W_all + b_W + b_U) + recurrent h @ U_all ----
    outs = xw_ref[...] + jnp.dot(h, u_ref[...],
                                 preferred_element_type=jnp.float32)  # (B, 4H)

    # torch.chunk(outs, 4, dim=1) -> f, i, o, c_tmp
    f = jax.nn.sigmoid(outs[:, 0 * H:1 * H])
    i = jax.nn.sigmoid(outs[:, 1 * H:2 * H])
    o = jax.nn.sigmoid(outs[:, 2 * H:3 * H])
    c_tmp = jnp.tanh(outs[:, 3 * H:4 * H])

    c_t = f * c_adj + i * c_tmp
    new_h = o * jnp.tanh(c_t)

    # Carry state in VMEM; write per-step outputs (written back once per step).
    h_scr[...] = new_h
    c_scr[...] = c_t
    h_out_ref[...] = new_h
    c_out_ref[...] = c_t


def tlstm_sequence(h0, c0, x_seq, t_seq, params):
    """Run the TLSTM cell over a whole sequence in ONE pallas_call.

    Args:
      h0, c0:  (B, H) float32 initial states.
      x_seq:   (T, B, D) float32 inputs.
      t_seq:   (T, B, 1) float32 elapsed-time factors.
      params:  dict of f32 weights (already stored as (in, out)).
    Returns:
      (h_seq, c_seq): each (T, B, H) float32 — per-step new_h and c_t.
    """
    T, B, D = x_seq.shape
    H = h0.shape[1]
    assert t_seq.shape == (T, B, 1)
    assert params["uall_w"].shape == (H, 4 * H)
    assert params["wall_w"].shape == (D, 4 * H)

    # Hoisted, well-shaped x-projection over the whole sequence (single large
    # MXU matmul; biases folded in once so the kernel never adds them).
    b_all = params["wall_b"] + params["uall_b"]                    # (1, 4H)
    xw = (x_seq.reshape(T * B, D) @ params["wall_w"] + b_all)
    xw = xw.reshape(T, B, 4 * H).astype(jnp.float32)

    out_shape = (
        jax.ShapeDtypeStruct((T, B, H), jnp.float32),
        jax.ShapeDtypeStruct((T, B, H), jnp.float32),
    )

    h_seq, c_seq = pl.pallas_call(
        _tlstm_seq_kernel,
        out_shape=out_shape,
        grid=(T,),
        in_specs=[
            # per-step tiles (new block every grid step)
            pl.BlockSpec((None, B, 4 * H), lambda s: (s, 0, 0)),   # xw
            pl.BlockSpec((None, B, 1), lambda s: (s, 0, 0)),       # t
            # VMEM-resident across the whole sequence (index_map ignores s)
            pl.BlockSpec((B, H), lambda s: (0, 0)),                # h0
            pl.BlockSpec((B, H), lambda s: (0, 0)),                # c0
            pl.BlockSpec((H, 4 * H), lambda s: (0, 0)),            # U_all
            pl.BlockSpec((H, H), lambda s: (0, 0)),                # W_d weight
            pl.BlockSpec((1, H), lambda s: (0, 0)),                # W_d bias
        ],
        out_specs=(
            pl.BlockSpec((None, B, H), lambda s: (s, 0, 0)),       # h_seq
            pl.BlockSpec((None, B, H), lambda s: (s, 0, 0)),       # c_seq
        ),
        scratch_shapes=[
            pltpu.VMEM((B, H), jnp.float32),                       # h carry
            pltpu.VMEM((B, H), jnp.float32),                       # c carry
        ],
        compiler_params=pltpu.CompilerParams(
            dimension_semantics=("arbitrary",),                    # recurrence
        ),
    )(xw, t_seq, h0, c0, params["uall_w"], params["wd_w"], params["wd_b"])

    return h_seq, c_seq


def tlstm_unit(h, c, x, t, params):
    """Single-step TLSTM_Unit.forward (T=1 specialization of the sequence kernel)."""
    h_seq, c_seq = tlstm_sequence(h, c, x[None], t[None], params)
    return h_seq[0], c_seq[0]


def init_params(key, input_dim, hidden_dim):
    """Deterministic init mirroring nn.Linear shapes (weights pre-transposed to (in, out))."""
    ks = jax.random.split(key, 6)

    def uniform(k, shape, fan_in):
        bound = 1.0 / jnp.sqrt(fan_in)
        return jax.random.uniform(k, shape, jnp.float32, -bound, bound)

    return {
        "wall_w": uniform(ks[0], (input_dim, 4 * hidden_dim), input_dim),
        "wall_b": uniform(ks[1], (1, 4 * hidden_dim), input_dim),
        "uall_w": uniform(ks[2], (hidden_dim, 4 * hidden_dim), hidden_dim),
        "uall_b": uniform(ks[3], (1, 4 * hidden_dim), hidden_dim),
        "wd_w": uniform(ks[4], (hidden_dim, hidden_dim), hidden_dim),
        "wd_b": uniform(ks[5], (1, hidden_dim), hidden_dim),
    }


def tlstm_step_ref(h, c, x, t, p):
    """Pure-JAX f32 reference of the PyTorch forward (one step)."""
    c_st = jnp.tanh(c @ p["wd_w"] + p["wd_b"])
    c_adj = c - c_st + c_st * t
    outs = x @ p["wall_w"] + p["wall_b"] + h @ p["uall_w"] + p["uall_b"]
    H = h.shape[1]
    f, i, o, c_tmp = (outs[:, :H], outs[:, H:2 * H],
                      outs[:, 2 * H:3 * H], outs[:, 3 * H:])
    f, i, o, c_tmp = (jax.nn.sigmoid(f), jax.nn.sigmoid(i),
                      jax.nn.sigmoid(o), jnp.tanh(c_tmp))
    c_t = f * c_adj + i * c_tmp
    return o * jnp.tanh(c_t), c_t


def tlstm_sequence_ref(h0, c0, x_seq, t_seq, p):
    """lax.scan of the single-step reference over the sequence."""
    def body(carry, xt):
        h, c = carry
        x, t = xt
        new_h, c_t = tlstm_step_ref(h, c, x, t, p)
        return (new_h, c_t), (new_h, c_t)

    _, (h_seq, c_seq) = jax.lax.scan(body, (h0, c0), (x_seq, t_seq))
    return h_seq, c_seq


if __name__ == "__main__":
    B, INPUT_DIM, HIDDEN_DIM, T = 8, 64, 128, 16

    key = jax.random.PRNGKey(0)
    k_h, k_c, k_x, k_t, k_p = jax.random.split(key, 5)

    h0 = jax.random.normal(k_h, (B, HIDDEN_DIM), jnp.float32)
    c0 = jax.random.normal(k_c, (B, HIDDEN_DIM), jnp.float32)
    x_seq = jax.random.normal(k_x, (T, B, INPUT_DIM), jnp.float32)
    # elapsed-time decay factor, one scalar per (step, batch element)
    t_seq = jax.random.uniform(k_t, (T, B, 1), jnp.float32, 0.0, 1.0)

    params = init_params(k_p, INPUT_DIM, HIDDEN_DIM)

    # --- full-sequence kernel (time loop inside one pallas_call) -------------
    h_seq, c_seq = tlstm_sequence(h0, c0, x_seq, t_seq, params)
    jax.block_until_ready((h_seq, c_seq))

    ref_h_seq, ref_c_seq = tlstm_sequence_ref(h0, c0, x_seq, t_seq, params)
    assert jnp.allclose(h_seq, ref_h_seq, atol=1e-3, rtol=1e-3), (
        float(jnp.max(jnp.abs(h_seq - ref_h_seq))))
    assert jnp.allclose(c_seq, ref_c_seq, atol=1e-3, rtol=1e-3), (
        float(jnp.max(jnp.abs(c_seq - ref_c_seq))))

    # --- single-step module semantics (TLSTM_Unit.forward) -------------------
    new_h, c_t = tlstm_unit(h0, c0, x_seq[0], t_seq[0], params)
    jax.block_until_ready((new_h, c_t))
    ref_h, ref_c = tlstm_step_ref(h0, c0, x_seq[0], t_seq[0], params)
    assert jnp.allclose(new_h, ref_h, atol=1e-3, rtol=1e-3), (
        float(jnp.max(jnp.abs(new_h - ref_h))))
    assert jnp.allclose(c_t, ref_c, atol=1e-3, rtol=1e-3), (
        float(jnp.max(jnp.abs(c_t - ref_c))))

    print("KERNEL_OK")
</pallas_src>

<mosaic_0001>
module attributes {stable_mosaic.version = 11 : i64} {
  func.func @_tlstm_seq_kernel(%arg0: i32, %arg1: memref<1x8x512xf32, #tpu.memory_space<vmem>>, %arg2: memref<1x8x1xf32, #tpu.memory_space<vmem>>, %arg3: memref<8x128xf32, #tpu.memory_space<vmem>>, %arg4: memref<8x128xf32, #tpu.memory_space<vmem>>, %arg5: memref<128x512xf32, #tpu.memory_space<vmem>>, %arg6: memref<128x128xf32, #tpu.memory_space<vmem>>, %arg7: memref<1x128xf32, #tpu.memory_space<vmem>>, %arg8: memref<1x8x128xf32, #tpu.memory_space<vmem>>, %arg9: memref<1x8x128xf32, #tpu.memory_space<vmem>>, %arg10: memref<8x128xf32, #tpu.memory_space<vmem>>, %arg11: memref<8x128xf32, #tpu.memory_space<vmem>>) attributes {dimension_semantics = [#tpu.dimension_semantics<arbitrary>], iteration_bounds = array<i64: 16>, scalar_prefetch = 0 : i64, scratch_operands = 2 : i64, tpu.core_type = #tpu.core_type<tc>, window_params = [{transform_indices = @transform_0, window_bounds = array<i64: 1, 8, 512>}, {transform_indices = @transform_1, window_bounds = array<i64: 1, 8, 1>}, {pipeline_mode = #tpu.pipeline_mode<synchronous>, transform_indices = @transform_2, window_bounds = array<i64: 8, 128>}, {pipeline_mode = #tpu.pipeline_mode<synchronous>, transform_indices = @transform_3, window_bounds = array<i64: 8, 128>}, {pipeline_mode = #tpu.pipeline_mode<synchronous>, transform_indices = @transform_4, window_bounds = array<i64: 128, 512>}, {pipeline_mode = #tpu.pipeline_mode<synchronous>, transform_indices = @transform_5, window_bounds = array<i64: 128, 128>}, {pipeline_mode = #tpu.pipeline_mode<synchronous>, transform_indices = @transform_6, window_bounds = array<i64: 1, 128>}, {transform_indices = @transform_7, window_bounds = array<i64: 1, 8, 128>}, {transform_indices = @transform_8, window_bounds = array<i64: 1, 8, 128>}]} {
    %c0_i32 = arith.constant 0 : i32
    %0 = arith.cmpi eq, %arg0, %c0_i32 : i32
    %1 = arith.extui %0 : i1 to i32
    %c0_i32_0 = arith.constant 0 : i32
    %2 = arith.cmpi ne, %1, %c0_i32_0 : i32
    scf.if %2 {
      %c0_30 = arith.constant 0 : index
      %c0_31 = arith.constant 0 : index
      %55 = vector.load %arg3[%c0_30, %c0_31] : memref<8x128xf32, #tpu.memory_space<vmem>>, vector<8x128xf32>
      %c0_32 = arith.constant 0 : index
      %c0_33 = arith.constant 0 : index
      %56 = vector.load %arg10[%c0_32, %c0_33] : memref<8x128xf32, #tpu.memory_space<vmem>>, vector<8x128xf32>
      tpu.vector_store %arg10[%c0_32, %c0_33], %55 {strides = array<i32>} : memref<8x128xf32, #tpu.memory_space<vmem>>, vector<8x128xf32>,
      %c0_34 = arith.constant 0 : index
      %c0_35 = arith.constant 0 : index
      %57 = vector.load %arg4[%c0_34, %c0_35] : memref<8x128xf32, #tpu.memory_space<vmem>>, vector<8x128xf32>
      %c0_36 = arith.constant 0 : index
      %c0_37 = arith.constant 0 : index
      %58 = vector.load %arg11[%c0_36, %c0_37] : memref<8x128xf32, #tpu.memory_space<vmem>>, vector<8x128xf32>
      tpu.vector_store %arg11[%c0_36, %c0_37], %57 {strides = array<i32>} : memref<8x128xf32, #tpu.memory_space<vmem>>, vector<8x128xf32>,
    } else {
    }
    %c0 = arith.constant 0 : index
    %c0_1 = arith.constant 0 : index
    %3 = vector.load %arg10[%c0, %c0_1] : memref<8x128xf32, #tpu.memory_space<vmem>>, vector<8x128xf32>
    %c0_2 = arith.constant 0 : index
    %c0_3 = arith.constant 0 : index
    %4 = vector.load %arg11[%c0_2, %c0_3] : memref<8x128xf32, #tpu.memory_space<vmem>>, vector<8x128xf32>
    %c0_4 = arith.constant 0 : index
    %c0_5 = arith.constant 0 : index
    %c0_6 = arith.constant 0 : index
    %5 = vector.load %arg2[%c0_4, %c0_5, %c0_6] : memref<1x8x1xf32, #tpu.memory_space<vmem>>, vector<1x8x1xf32>
    %6 = vector.shape_cast %5 : vector<1x8x1xf32> to vector<8x1xf32>
    %c0_7 = arith.constant 0 : index
    %c0_8 = arith.constant 0 : index
    %7 = vector.load %arg6[%c0_7, %c0_8] : memref<128x128xf32, #tpu.memory_space<vmem>>, vector<128x128xf32>
    %cst = arith.constant dense<0.000000e+00> : vector<8x128xf32>
    %8 = tpu.matmul %4, %7, %cst {dimension_numbers = #tpu.dot_dimension_numbers<[1], [0], [0], [1], [0, 0, 1, 1], [], []>} : vector<8x128xf32>, vector<128x128xf32>, vector<8x128xf32> -> vector<8x128xf32>
    %c0_9 = arith.constant 0 : index
    %c0_10 = arith.constant 0 : index
    %9 = vector.load %arg7[%c0_9, %c0_10] : memref<1x128xf32, #tpu.memory_space<vmem>>, vector<1x128xf32>
    %10 = vector.broadcast %9 : vector<1x128xf32> to vector<8x128xf32>
    %11 = arith.addf %8, %10 : vector<8x128xf32>
    %12 = math.tanh %11 : vector<8x128xf32>
    %13 = arith.subf %4, %12 : vector<8x128xf32>
    %14 = vector.broadcast %6 : vector<8x1xf32> to vector<8x128xf32>
    %15 = arith.mulf %12, %14 : vector<8x128xf32>
    %16 = arith.addf %13, %15 : vector<8x128xf32>
    %c0_11 = arith.constant 0 : index
    %c0_12 = arith.constant 0 : index
    %c0_13 = arith.constant 0 : index
    %17 = vector.load %arg1[%c0_11, %c0_12, %c0_13] : memref<1x8x512xf32, #tpu.memory_space<vmem>>, vector<1x8x512xf32>
    %18 = vector.shape_cast %17 : vector<1x8x512xf32> to vector<8x512xf32>
    %c0_14 = arith.constant 0 : index
    %c0_15 = arith.constant 0 : index
    %19 = vector.load %arg5[%c0_14, %c0_15] : memref<128x512xf32, #tpu.memory_space<vmem>>, vector<128x512xf32>
    %cst_16 = arith.constant dense<0.000000e+00> : vector<8x512xf32>
    %20 = tpu.matmul %3, %19, %cst_16 {dimension_numbers = #tpu.dot_dimension_numbers<[1], [0], [0], [1], [0, 0, 1, 1], [], []>} : vector<8x128xf32>, vector<128x512xf32>, vector<8x512xf32> -> vector<8x512xf32>
    %21 = arith.addf %18, %20 : vector<8x512xf32>
    %22 = vector.extract_strided_slice %21 {offsets = [0, 0], sizes = [8, 128], strides = [1, 1]} : vector<8x512xf32> to vector<8x128xf32>
    %23 = arith.negf %22 : vector<8x128xf32>
    %24 = math.exp %23 : vector<8x128xf32>
    %cst_17 = arith.constant 1.000000e+00 : f32
    %25 = vector.broadcast %cst_17 : f32 to vector<8x128xf32>
    %26 = arith.addf %25, %24 : vector<8x128xf32>
    %27 = arith.divf %25, %26 : vector<8x128xf32>
    %28 = vector.extract_strided_slice %21 {offsets = [0, 128], sizes = [8, 128], strides = [1, 1]} : vector<8x512xf32> to vector<8x128xf32>
    %29 = arith.negf %28 : vector<8x128xf32>
    %30 = math.exp %29 : vector<8x128xf32>
    %cst_18 = arith.constant 1.000000e+00 : f32
    %31 = vector.broadcast %cst_18 : f32 to vector<8x128xf32>
    %32 = arith.addf %31, %30 : vector<8x128xf32>
    %33 = arith.divf %31, %32 : vector<8x128xf32>
    %34 = vector.extract_strided_slice %21 {offsets = [0, 256], sizes = [8, 128], strides = [1, 1]} : vector<8x512xf32> to vector<8x128xf32>
    %35 = arith.negf %34 : vector<8x128xf32>
    %36 = math.exp %35 : vector<8x128xf32>
    %cst_19 = arith.constant 1.000000e+00 : f32
    %37 = vector.broadcast %cst_19 : f32 to vector<8x128xf32>
    %38 = arith.addf %37, %36 : vector<8x128xf32>
    %39 = arith.divf %37, %38 : vector<8x128xf32>
    %40 = vector.extract_strided_slice %21 {offsets = [0, 384], sizes = [8, 128], strides = [1, 1]} : vector<8x512xf32> to vector<8x128xf32>
    %41 = math.tanh %40 : vector<8x128xf32>
    %42 = arith.mulf %27, %16 : vector<8x128xf32>
    %43 = arith.mulf %33, %41 : vector<8x128xf32>
    %44 = arith.addf %42, %43 : vector<8x128xf32>
    %45 = math.tanh %44 : vector<8x128xf32>
    %46 = arith.mulf %39, %45 : vector<8x128xf32>
    %c0_20 = arith.constant 0 : index
    %c0_21 = arith.constant 0 : index
    %47 = vector.load %arg10[%c0_20, %c0_21] : memref<8x128xf32, #tpu.memory_space<vmem>>, vector<8x128xf32>
    tpu.vector_store %arg10[%c0_20, %c0_21], %46 {strides = array<i32>} : memref<8x128xf32, #tpu.memory_space<vmem>>, vector<8x128xf32>,
    %c0_22 = arith.constant 0 : index
    %c0_23 = arith.constant 0 : index
    %48 = vector.load %arg11[%c0_22, %c0_23] : memref<8x128xf32, #tpu.memory_space<vmem>>, vector<8x128xf32>
    tpu.vector_store %arg11[%c0_22, %c0_23], %44 {strides = array<i32>} : memref<8x128xf32, #tpu.memory_space<vmem>>, vector<8x128xf32>,
    %c0_24 = arith.constant 0 : index
    %c0_25 = arith.constant 0 : index
    %c0_26 = arith.constant 0 : index
    %49 = vector.load %arg8[%c0_24, %c0_25, %c0_26] : memref<1x8x128xf32, #tpu.memory_space<vmem>>, vector<1x8x128xf32>
    %50 = vector.shape_cast %49 : vector<1x8x128xf32> to vector<8x128xf32>
    %51 = vector.shape_cast %46 : vector<8x128xf32> to vector<1x8x128xf32>
    tpu.vector_store %arg8[%c0_24, %c0_25, %c0_26], %51 {strides = array<i32>} : memref<1x8x128xf32, #tpu.memory_space<vmem>>, vector<1x8x128xf32>,
    %c0_27 = arith.constant 0 : index
    %c0_28 = arith.constant 0 : index
    %c0_29 = arith.constant 0 : index
    %52 = vector.load %arg9[%c0_27, %c0_28, %c0_29] : memref<1x8x128xf32, #tpu.memory_space<vmem>>, vector<1x8x128xf32>
    %53 = vector.shape_cast %52 : vector<1x8x128xf32> to vector<8x128xf32>
    %54 = vector.shape_cast %44 : vector<8x128xf32> to vector<1x8x128xf32>
    tpu.vector_store %arg9[%c0_27, %c0_28, %c0_29], %54 {strides = array<i32>} : memref<1x8x128xf32, #tpu.memory_space<vmem>>, vector<1x8x128xf32>,
    return
  }
  func.func @transform_0(%arg0: i32) -> (i32, i32, i32) {
    %c0_i32 = arith.constant 0 : i32
    %c0_i32_0 = arith.constant 0 : i32
    %c0_i32_1 = arith.constant 0 : i32
    return %arg0, %c0_i32, %c0_i32_0 : i32, i32, i32
  }
  func.func @transform_1(%arg0: i32) -> (i32, i32, i32) {
    %c0_i32 = arith.constant 0 : i32
    %c0_i32_0 = arith.constant 0 : i32
    %c0_i32_1 = arith.constant 0 : i32
    return %arg0, %c0_i32, %c0_i32_0 : i32, i32, i32
  }
  func.func @transform_2(%arg0: i32) -> (i32, i32) {
    %c0_i32 = arith.constant 0 : i32
    %c0_i32_0 = arith.constant 0 : i32
    %c0_i32_1 = arith.constant 0 : i32
    return %c0_i32, %c0_i32_0 : i32, i32
  }
  func.func @transform_3(%arg0: i32) -> (i32, i32) {
    %c0_i32 = arith.constant 0 : i32
    %c0_i32_0 = arith.constant 0 : i32
    %c0_i32_1 = arith.constant 0 : i32
    return %c0_i32, %c0_i32_0 : i32, i32
  }
  func.func @transform_4(%arg0: i32) -> (i32, i32) {
    %c0_i32 = arith.constant 0 : i32
    %c0_i32_0 = arith.constant 0 : i32
    %c0_i32_1 = arith.constant 0 : i32
    return %c0_i32, %c0_i32_0 : i32, i32
  }
  func.func @transform_5(%arg0: i32) -> (i32, i32) {
    %c0_i32 = arith.constant 0 : i32
    %c0_i32_0 = arith.constant 0 : i32
    %c0_i32_1 = arith.constant 0 : i32
    return %c0_i32, %c0_i32_0 : i32, i32
  }
  func.func @transform_6(%arg0: i32) -> (i32, i32) {
    %c0_i32 = arith.constant 0 : i32
    %c0_i32_0 = arith.constant 0 : i32
    %c0_i32_1 = arith.constant 0 : i32
    return %c0_i32, %c0_i32_0 : i32, i32
  }
  func.func @transform_7(%arg0: i32) -> (i32, i32, i32) {
    %c0_i32 = arith.constant 0 : i32
    %c0_i32_0 = arith.constant 0 : i32
    %c0_i32_1 = arith.constant 0 : i32
    return %arg0, %c0_i32, %c0_i32_0 : i32, i32, i32
  }
  func.func @transform_8(%arg0: i32) -> (i32, i32, i32) {
    %c0_i32 = arith.constant 0 : i32
    %c0_i32_0 = arith.constant 0 : i32
    %c0_i32_1 = arith.constant 0 : i32
    return %arg0, %c0_i32, %c0_i32_0 : i32, i32, i32
  }
}

</mosaic_0001>

<llo_original>
// kernel: tpu_custom_call.1
$region0: #{tpu_custom_call.1}
  #allocation0 [shape = 'u32[]', space=smem, size = 0x4, offset = 0x4, fixed_abs, tag = 'smem constant byte address 0x4 - core index']
  #allocation1 [shape = 'u32[144,128]{1,0:T(1,128)}', space=vmem, size = 0x12000, scoped, tag = 'internal scratch']
  #allocation2 [shape = 'f32[8,128]{1,0:T(8,128)}', space=vmem, size = 0x1000, scoped, tag = 'scratch operand']
  #allocation3 [shape = 'f32[8,128]{1,0:T(8,128)}', space=vmem, size = 0x1000, scoped, tag = 'scratch operand']
  %s0 = inlined_call_operand.hbm [shape: f32[16,8,512], index: 0, kind: input, shape index: {}]
  %s1 = inlined_call_operand.vmem [shape: f32[16,8,1], index: 1, kind: input, shape index: {}]
  %s2 = inlined_call_operand.vmem [shape: f32[8,128], index: 2, kind: input, shape index: {}]
  %s3 = inlined_call_operand.vmem [shape: f32[8,128], index: 3, kind: input, shape index: {}]
  %s4 = inlined_call_operand.hbm [shape: f32[128,512], index: 4, kind: input, shape index: {}]
  %s5 = inlined_call_operand.vmem [shape: f32[128,128], index: 5, kind: input, shape index: {}]
  %s6 = inlined_call_operand.vmem [shape: f32[1,128], index: 6, kind: input, shape index: {}]
  %s7 = inlined_call_operand.hbm [shape: f32[16,8,128], index: 7, kind: output, shape index: {0}]
  %s8 = inlined_call_operand.hbm [shape: f32[16,8,128], index: 8, kind: output, shape index: {1}]
  %9 = xla_tuple %s7, %s8
  %s10 = sld [smem:[#allocation0]]
  $region81: #{tpu_custom_call.1} parent=0
    _
  %s12 = ssub.s32 1, %s10
  %s13 = scalar_select 0, %s12, %s10
  $region1: #{tpu_custom_call.1} parent=0
    #allocation4 [shape = 'u8[32768]{0}', space=vmem, size = 0x8000, scoped, tag = 'input window, operand 0']
    #allocation5 [shape = 's32[2]{0}', space=sflag, size = 0x8, scoped, tag = 'scoped memory for tpu_custom_call.1']
    #allocation6 [shape = 's32[2]{0}', space=sflag, size = 0x8, scoped, tag = 'scoped memory for tpu_custom_call.1']
    #allocation7 [shape = 'u8[262144]{0}', space=vmem, size = 0x40000, scoped, tag = 'input window, operand 4, single buffered']
    #allocation8 [shape = 's32[1]{0}', space=sflag, size = 0x4, scoped, tag = 'scoped memory for tpu_custom_call.1']
    #allocation9 [shape = 'u8[8192]{0}', space=vmem, size = 0x2000, scoped, tag = 'output window, operand 0']
    #allocation10 [shape = 'u8[8192]{0}', space=vmem, size = 0x2000, scoped, tag = 'output window, operand 1']
    #allocation11 [shape = 's32[2]{0}', space=sflag, size = 0x8, scoped, tag = 'scoped memory for tpu_custom_call.1']
    %14 = vsyncpa [#allocation5], 0
    %s15 = scalar_lea.sflag [#allocation5], 1
    %16 = vsyncpa %s15, 0
    %17 = vsyncpa [#allocation8], 0
    %18 = vsyncpa [#allocation6], 0
    %s19 = scalar_lea.sflag [#allocation6], 1
    %20 = vsyncpa %s19, 0
    %21 = vsyncpa [#allocation11], 0
    %s22 = scalar_lea.sflag [#allocation11], 1
    %23 = vsyncpa %s22, 0
    loop: start=0, step=1, limit=18
    $region2: #{tpu_custom_call.1} parent=1 // loop_pre_header
      _
    $region3: #{tpu_custom_call.1} parent=1 // loop_header
      %s25 = sphi 0, %s29
      %p26 = scmp.ge.s32.totalorder %s25, 18
      %s35 = sphi 0, %s37
      %s38 = sphi 0, %s35
      %s39 = sphi 0, %s38
      %s55 = sphi 0, %s39
      %s61 = sphi 0, %s63
      %s64 = sphi 0, %s61
      %s65 = sphi 0, %s64
      %s81 = sphi 0, %s65
      %s85 = sphi 0, %s85
      %s87 = sphi 0, %s85
      %s88 = sphi 0, %s87
      %s102 = sphi 0, %s88
      %s106 = sphi 0, %s106
      %s108 = sphi 0, %s106
      %s109 = sphi 0, %s108
      %s123 = sphi 0, %s109
      %s127 = sphi 0, %s127
      %s129 = sphi 0, %s127
      %s130 = sphi 0, %s129
      %s144 = sphi 0, %s130
      %s148 = sphi 0, %s148
      %s150 = sphi 0, %s148
      %s151 = sphi 0, %s150
      %s165 = sphi 0, %s151
      %s169 = sphi 0, %s169
      %s171 = sphi 0, %s169
      %s172 = sphi 0, %s171
      %s186 = sphi 0, %s172
      %s192 = sphi 0, %s194
      %s195 = sphi 0, %s192
      %s196 = sphi 0, %s195
      %s212 = sphi 0, %s196
      %s218 = sphi 0, %s220
      %s221 = sphi 0, %s218
      %s222 = sphi 0, %s221
      %s238 = sphi 0, %s222
    $region4: #{tpu_custom_call.1} parent=1 // loop_header_branch
      %28 = sbr.rel (%p26) target = $region8
    $region5: #{tpu_custom_call.1} parent=1 // loop_body
      %s30 = ssub.s32 %s25, 1
      %s31 = ssub.s32 %s25, 2
      %s32 = sadd.s32 %s25, 1
      %s33 = ssub.s32 %s25, %s32
      %p34 = scmp.eq.s32.totalorder %s33, 0
      %s36 = sadd.s32 %s35, 1
      %s37 = scalar_select %p34, %s35, %s36
      %p40 = pneg %p34
      %p41 = scmp.eq.s32.totalorder %s25, 15
      %p42 = por %p40, %p41
      %p43 = scmp.ne.s32.totalorder %s35, %s38
      %p44 = scmp.eq.s32.totalorder %s25, 0
      %p45 = por %p43, %p44
      %p46 = scmp.ne.s32.totalorder %s35, %s38
      %p47 = scmp.eq.s32.totalorder %s30, 15
      %p48 = por %p46, %p47
      %p49 = scmp.ne.s32.totalorder %s38, %s39
      %p50 = scmp.eq.s32.totalorder %s30, 0
      %p51 = por %p49, %p50
      %p52 = scmp.ne.s32.totalorder %s38, %s39
      %p53 = scmp.eq.s32.totalorder %s31, 15
      %p54 = por %p52, %p53
      %p56 = scmp.ne.s32.totalorder %s39, %s55
      %p57 = scmp.eq.s32.totalorder %s31, 0
      %p58 = por %p56, %p57
      %s59 = ssub.s32 %s25, %s32
      %p60 = scmp.eq.s32.totalorder %s59, 0
      %s62 = sadd.s32 %s61, 1
      %s63 = scalar_select %p60, %s61, %s62
      %p66 = pneg %p60
      %p67 = scmp.eq.s32.totalorder %s25, 15
      %p68 = por %p66, %p67
      %p69 = scmp.ne.s32.totalorder %s61, %s64
      %p70 = scmp.eq.s32.totalorder %s25, 0
      %p71 = por %p69, %p70
      %p72 = scmp.ne.s32.totalorder %s61, %s64
      %p73 = scmp.eq.s32.totalorder %s30, 15
      %p74 = por %p72, %p73
      %p75 = scmp.ne.s32.totalorder %s64, %s65
      %p76 = scmp.eq.s32.totalorder %s30, 0
      %p77 = por %p75, %p76
      %p78 = scmp.ne.s32.totalorder %s64, %s65
      %p79 = scmp.eq.s32.totalorder %s31, 15
      %p80 = por %p78, %p79
      %p82 = scmp.ne.s32.totalorder %s65, %s81
      %p83 = scmp.eq.s32.totalorder %s31, 0
      %p84 = por %p82, %p83
      %s86 = sadd.s32 %s85, 1
      %p89 = scmp.eq.s32.totalorder %s25, 15
      %p90 = scmp.ne.s32.totalorder %s85, %s87
      %p91 = scmp.eq.s32.totalorder %s25, 0
      %p92 = por %p90, %p91
      %p93 = scmp.ne.s32.totalorder %s85, %s87
      %p94 = scmp.eq.s32.totalorder %s30, 15
      %p95 = por %p93, %p94
      %p96 = scmp.ne.s32.totalorder %s87, %s88
      %p97 = scmp.eq.s32.totalorder %s30, 0
      %p98 = por %p96, %p97
      %p99 = scmp.ne.s32.totalorder %s87, %s88
      %p100 = scmp.eq.s32.totalorder %s31, 15
      %p101 = por %p99, %p100
      %p103 = scmp.ne.s32.totalorder %s88, %s102
      %p104 = scmp.eq.s32.totalorder %s31, 0
      %p105 = por %p103, %p104
      %s107 = sadd.s32 %s106, 1
      %p110 = scmp.eq.s32.totalorder %s25, 15
      %p111 = scmp.ne.s32.totalorder %s106, %s108
      %p112 = scmp.eq.s32.totalorder %s25, 0
      %p113 = por %p111, %p112
      %p114 = scmp.ne.s32.totalorder %s106, %s108
      %p115 = scmp.eq.s32.totalorder %s30, 15
      %p116 = por %p114, %p115
      %p117 = scmp.ne.s32.totalorder %s108, %s109
      %p118 = scmp.eq.s32.totalorder %s30, 0
      %p119 = por %p117, %p118
      %p120 = scmp.ne.s32.totalorder %s108, %s109
      %p121 = scmp.eq.s32.totalorder %s31, 15
      %p122 = por %p120, %p121
      %p124 = scmp.ne.s32.totalorder %s109, %s123
      %p125 = scmp.eq.s32.totalorder %s31, 0
      %p126 = por %p124, %p125
      %s128 = sadd.s32 %s127, 1
      %p131 = scmp.eq.s32.totalorder %s25, 15
      %p132 = scmp.ne.s32.totalorder %s127, %s129
      %p133 = scmp.eq.s32.totalorder %s25, 0
      %p134 = por %p132, %p133
      %p135 = scmp.ne.s32.totalorder %s127, %s129
      %p136 = scmp.eq.s32.totalorder %s30, 15
      %p137 = por %p135, %p136
      %p138 = scmp.ne.s32.totalorder %s129, %s130
      %p139 = scmp.eq.s32.totalorder %s30, 0
      %p140 = por %p138, %p139
      %p141 = scmp.ne.s32.totalorder %s129, %s130
      %p142 = scmp.eq.s32.totalorder %s31, 15
      %p143 = por %p141, %p142
      %p145 = scmp.ne.s32.totalorder %s130, %s144
      %p146 = scmp.eq.s32.totalorder %s31, 0
      %p147 = por %p145, %p146
      %s149 = sadd.s32 %s148, 1
      %p152 = scmp.eq.s32.totalorder %s25, 15
      %p153 = scmp.ne.s32.totalorder %s148, %s150
      %p154 = scmp.eq.s32.totalorder %s25, 0
      %p155 = por %p153, %p154
      %p156 = scmp.ne.s32.totalorder %s148, %s150
      %p157 = scmp.eq.s32.totalorder %s30, 15
      %p158 = por %p156, %p157
      %p159 = scmp.ne.s32.totalorder %s150, %s151
      %p160 = scmp.eq.s32.totalorder %s30, 0
      %p161 = por %p159, %p160
      %p162 = scmp.ne.s32.totalorder %s150, %s151
      %p163 = scmp.eq.s32.totalorder %s31, 15
      %p164 = por %p162, %p163
      %p166 = scmp.ne.s32.totalorder %s151, %s165
      %p167 = scmp.eq.s32.totalorder %s31, 0
      %p168 = por %p166, %p167
      %s170 = sadd.s32 %s169, 1
      %p173 = scmp.eq.s32.totalorder %s25, 15
      %p174 = scmp.ne.s32.totalorder %s169, %s171
      %p175 = scmp.eq.s32.totalorder %s25, 0
      %p176 = por %p174, %p175
      %p177 = scmp.ne.s32.totalorder %s169, %s171
      %p178 = scmp.eq.s32.totalorder %s30, 15
      %p179 = por %p177, %p178
      %p180 = scmp.ne.s32.totalorder %s171, %s172
      %p181 = scmp.eq.s32.totalorder %s30, 0
      %p182 = por %p180, %p181
      %p183 = scmp.ne.s32.totalorder %s171, %s172
      %p184 = scmp.eq.s32.totalorder %s31, 15
      %p185 = por %p183, %p184
      %p187 = scmp.ne.s32.totalorder %s172, %s186
      %p188 = scmp.eq.s32.totalorder %s31, 0
      %p189 = por %p187, %p188
      %s190 = ssub.s32 %s25, %s32
      %p191 = scmp.eq.s32.totalorder %s190, 0
      %s193 = sadd.s32 %s192, 1
      %s194 = scalar_select %p191, %s192, %s193
      %p197 = pneg %p191
      %p198 = scmp.eq.s32.totalorder %s25, 15
      %p199 = por %p197, %p198
      %p200 = scmp.ne.s32.totalorder %s192, %s195
      %p201 = scmp.eq.s32.totalorder %s25, 0
      %p202 = por %p200, %p201
      %p203 = scmp.ne.s32.totalorder %s192, %s195
      %p204 = scmp.eq.s32.totalorder %s30, 15
      %p205 = por %p203, %p204
      %p206 = scmp.ne.s32.totalorder %s195, %s196
      %p207 = scmp.eq.s32.totalorder %s30, 0
      %p208 = por %p206, %p207
      %p209 = scmp.ne.s32.totalorder %s195, %s196
      %p210 = scmp.eq.s32.totalorder %s31, 15
      %p211 = por %p209, %p210
      %p213 = scmp.ne.s32.totalorder %s196, %s212
      %p214 = scmp.eq.s32.totalorder %s31, 0
      %p215 = por %p213, %p214
      %s216 = ssub.s32 %s25, %s32
      %p217 = scmp.eq.s32.totalorder %s216, 0
      %s219 = sadd.s32 %s218, 1
      %s220 = scalar_select %p217, %s218, %s219
      %p223 = pneg %p217
      %p224 = scmp.eq.s32.totalorder %s25, 15
      %p225 = por %p223, %p224
      %p226 = scmp.ne.s32.totalorder %s218, %s221
      %p227 = scmp.eq.s32.totalorder %s25, 0
      %p228 = por %p226, %p227
      %p229 = scmp.ne.s32.totalorder %s218, %s221
      %p230 = scmp.eq.s32.totalorder %s30, 15
      %p231 = por %p229, %p230
      %p232 = scmp.ne.s32.totalorder %s221, %s222
      %p233 = scmp.eq.s32.totalorder %s30, 0
      %p234 = por %p232, %p233
      %p235 = scmp.ne.s32.totalorder %s221, %s222
      %p236 = scmp.eq.s32.totalorder %s31, 15
      %p237 = por %p235, %p236
      %p239 = scmp.ne.s32.totalorder %s222, %s238
      %p240 = scmp.eq.s32.totalorder %s31, 0
      %p241 = por %p239, %p240
      %p242 = scmp.le.s32.totalorder 1, %s25
      %p243 = scmp.lt.s32.totalorder %s25, 17
      %p244 = pnand %p242, %p243
      %p245 = pneg %p244
      // Predicated region
      $region9: #{tpu_custom_call.1} parent=5 // pred_check
        _
      $region10: #{tpu_custom_call.1} parent=5 // pred_check_branch
        %247 = sbr.rel (%p244) target = $region12
      $region11: #{tpu_custom_call.1} parent=5 // pred_region
        %s248 = ssub.s32 %s25, 1
        // Predicated region
        $region13: #{tpu_custom_call.1} parent=11 // pred_check
          %p249 = pneg %p98
        $region14: #{tpu_custom_call.1} parent=11 // pred_check_branch
          %251 = sbr.rel (%p249) target = $region16
        $region15: #{tpu_custom_call.1} parent=11 // pred_region
          _
        $region16: #{tpu_custom_call.1} parent=11 // pred_fallthru
          _
        // Predicated region
        $region17: #{tpu_custom_call.1} parent=11 // pred_check
          %p252 = pneg %p119
        $region18: #{tpu_custom_call.1} parent=11 // pred_check_branch
          %254 = sbr.rel (%p252) target = $region20
        $region19: #{tpu_custom_call.1} parent=11 // pred_region
          _
        $region20: #{tpu_custom_call.1} parent=11 // pred_fallthru
          _
        // Predicated region
        $region21: #{tpu_custom_call.1} parent=11 // pred_check
          %p255 = pneg %p140
        $region22: #{tpu_custom_call.1} parent=11 // pred_check_branch
          %257 = sbr.rel (%p255) target = $region24
        $region23: #{tpu_custom_call.1} parent=11 // pred_region
          %s259 = ssub.s32 8192, 8192
          %260 = vsyncadd [#allocation8], %s259
          %s261 = sshll.u32 [#allocation7], 4
          %s262 = int_to_ptr.vmem [resolvable:$true] %s261
          %267 = dma.hbm_to_vmem [thread:$0]  %s4, 8192, %s262, [#allocation8], 512, 512, 32
        $region24: #{tpu_custom_call.1} parent=11 // pred_fallthru
          _
        // Predicated region
        $region25: #{tpu_custom_call.1} parent=11 // pred_check
          %p268 = pneg %p161
        $region26: #{tpu_custom_call.1} parent=11 // pred_check_branch
          %270 = sbr.rel (%p268) target = $region28
        $region27: #{tpu_custom_call.1} parent=11 // pred_region
          _
        $region28: #{tpu_custom_call.1} parent=11 // pred_fallthru
          _
        // Predicated region
        $region29: #{tpu_custom_call.1} parent=11 // pred_check
          %p271 = pneg %p182
        $region30: #{tpu_custom_call.1} parent=11 // pred_check_branch
          %273 = sbr.rel (%p271) target = $region32
        $region31: #{tpu_custom_call.1} parent=11 // pred_region
          _
        $region32: #{tpu_custom_call.1} parent=11 // pred_fallthru
          _
      $region12: #{tpu_custom_call.1} parent=5 // pred_fallthru
        _
      %p274 = scmp.lt.s32.totalorder %s25, 16
      // Predicated region
      $region33: #{tpu_custom_call.1} parent=5 // pred_check
        %p275 = pneg %p274
      $region34: #{tpu_custom_call.1} parent=5 // pred_check_branch
        %277 = sbr.rel (%p275) target = $region36
      $region35: #{tpu_custom_call.1} parent=5 // pred_region
        // Predicated region
        $region37: #{tpu_custom_call.1} parent=35 // pred_check
          %p278 = pneg %p45
        $region38: #{tpu_custom_call.1} parent=35 // pred_check_branch
          %280 = sbr.rel (%p278) target = $region40
        $region39: #{tpu_custom_call.1} parent=35 // pred_region
          %s281 = sand.u32 %s35, 1
          %s282 = scalar_lea.sflag [#allocation5], %s281
          %s283 = sand.u32 %s35, 1
          %s284 = smul.addr %s283, 32
          %s285 = scalar_lea.vmem [#allocation4], %s284
          %s287 = ssub.s32 512, 512
          %288 = vsyncadd %s282, %s287
          %s289 = smul.addr %s25, 4
          %s290 = smul.addr %s289, 128
          %s291 = scalar_lea.hbm %s0, %s290
          %s293 = sshll.u32 %s285, 4
          %s294 = int_to_ptr.vmem [resolvable:$true] %s293
          %296 = dma.hbm_to_vmem [thread:$0]  %s291, 512, %s294, %s282
        $region40: #{tpu_custom_call.1} parent=35 // pred_fallthru
          _
        // Predicated region
        $region41: #{tpu_custom_call.1} parent=35 // pred_check
          %p297 = pneg %p71
        $region42: #{tpu_custom_call.1} parent=35 // pred_check_branch
          %299 = sbr.rel (%p297) target = $region44
        $region43: #{tpu_custom_call.1} parent=35 // pred_region
          %p300 = scmp.lt.s32.totalorder %s25, 15
          %s301 = scalar_select %p300, %s25, 15
          %s302 = smul.addr %s301, 8
          %s303 = scalar_lea.vmem %s1, %s302
        $region44: #{tpu_custom_call.1} parent=35 // pred_fallthru
          _
      $region36: #{tpu_custom_call.1} parent=5 // pred_fallthru
        _
      %p304 = scmp.le.s32.totalorder 1, %s25
      %p305 = scmp.lt.s32.totalorder %s25, 17
      %p306 = pnand %p304, %p305
      %p307 = pneg %p306
      // Predicated region
      $region45: #{tpu_custom_call.1} parent=5 // pred_check
        _
      $region46: #{tpu_custom_call.1} parent=5 // pred_check_branch
        %309 = sbr.rel (%p306) target = $region48
      $region47: #{tpu_custom_call.1} parent=5 // pred_region
        %s310 = ssub.s32 %s25, 1
        %s311 = sand.u32 %s38, 1
        %s312 = scalar_lea.sflag [#allocation5], %s311
        %s313 = sand.u32 %s38, 1
        %s314 = smul.addr %s313, 32
        %s315 = scalar_lea.vmem [#allocation4], %s314
        // Predicated region
        $region49: #{tpu_custom_call.1} parent=47 // pred_check
          %p316 = pneg %p51
        $region50: #{tpu_custom_call.1} parent=47 // pred_check_branch
          %318 = sbr.rel (%p316) target = $region52
        $region51: #{tpu_custom_call.1} parent=47 // pred_region
          %319 = dma.done %s312, 512
        $region52: #{tpu_custom_call.1} parent=47 // pred_fallthru
          _
        // Predicated region
        $region53: #{tpu_custom_call.1} parent=47 // pred_check
          %p320 = pneg %p140
        $region54: #{tpu_custom_call.1} parent=47 // pred_check_branch
          %322 = sbr.rel (%p320) target = $region56
        $region55: #{tpu_custom_call.1} parent=47 // pred_region
          %323 = dma.done [#allocation8], 8192
        $region56: #{tpu_custom_call.1} parent=47 // pred_fallthru
          _
        %s324 = sand.u32 %s38, 1
        %s325 = scalar_lea.sflag [#allocation5], %s324
        %s326 = sand.u32 %s38, 1
        %s327 = smul.addr %s326, 32
        %s328 = scalar_lea.vmem [#allocation4], %s327
        %p329 = pneg %p51
        %p330 = pneg %p48
        %p331 = scmp.lt.s32.totalorder %s30, 15
        %s332 = scalar_select %p331, %s30, 15
        %s333 = smul.addr %s332, 8
        %s334 = scalar_lea.vmem %s1, %s333
        %p335 = pneg %p77
        %p336 = pneg %p74
        %p337 = pneg %p98
        %p338 = pneg %p95
        %p339 = pneg %p119
        %p340 = pneg %p116
        %p341 = pneg %p140
        %p342 = pneg %p137
        %p343 = pneg %p161
        %p344 = pneg %p158
        %p345 = pneg %p182
        %p346 = pneg %p179
        %p347 = pneg %p208
        %p348 = pneg %p205
        %s349 = sand.u32 %s195, 1
        %s350 = scalar_lea.sflag [#allocation6], %s349
        %s351 = sand.u32 %s195, 1
        %s352 = smul.addr %s351, 8
        %s353 = scalar_lea.vmem [#allocation9], %s352
        %p354 = pneg %p234
        %p355 = pneg %p231
        %s356 = sand.u32 %s221, 1
        %s357 = scalar_lea.sflag [#allocation11], %s356
        %s358 = sand.u32 %s221, 1
        %s359 = smul.addr %s358, 8
        %s360 = scalar_lea.vmem [#allocation10], %s359
        %p361 = scmp.lt.s32.totalorder %s30, 15
        %s362 = scalar_select %p361, %s30, 15
        %s363 = smul.addr %s362, 8
        %s364 = scalar_lea.vmem %s1, %s363
        %p365 = scmp.eq.s32.totalorder %s30, 0
        // Predicated region
        $region57: #{tpu_custom_call.1} parent=47 // pred_check
          %p366 = pneg %p365
        $region58: #{tpu_custom_call.1} parent=47 // pred_check_branch
          %368 = sbr.rel (%p366) target = $region60
        $region59: #{tpu_custom_call.1} parent=47 // pred_region
          %v369 = vld [vmem:[%s2] sm:$0xff]
          %370 = vst [vmem:[#allocation2] sm:$0xff] %v369
          %v371 = vld [vmem:[%s3] sm:$0xff]
          %372 = vst [vmem:[#allocation3] sm:$0xff] %v371
        $region60: #{tpu_custom_call.1} parent=47 // pred_fallthru
          _
        %v373 = vld [vmem:[#allocation2] sm:$0xff]
        %v374 = vld [vmem:[#allocation3] sm:$0xff]
        %v375 = vld [vmem:[%s364] sm:$0xff]
        %v376 = vld [vmem:[%s5] sm:$0xff]
        %v377 = vld [vmem:[%s5 + $0x8] sm:$0xff]
        %v378 = vld [vmem:[%s5 + $0x10] sm:$0xff]
        %v379 = vld [vmem:[%s5 + $0x18] sm:$0xff]
        %v380 = vld [vmem:[%s5 + $0x20] sm:$0xff]
        %v381 = vld [vmem:[%s5 + $0x28] sm:$0xff]
        %v382 = vld [vmem:[%s5 + $0x30] sm:$0xff]
        %v383 = vld [vmem:[%s5 + $0x38] sm:$0xff]
        %v384 = vld [vmem:[%s5 + $0x40] sm:$0xff]
        %v385 = vld [vmem:[%s5 + $0x48] sm:$0xff]
        %v386 = vld [vmem:[%s5 + $0x50] sm:$0xff]
        %v387 = vld [vmem:[%s5 + $0x58] sm:$0xff]
        %v388 = vld [vmem:[%s5 + $0x60] sm:$0xff]
        %v389 = vld [vmem:[%s5 + $0x68] sm:$0xff]
        %v390 = vld [vmem:[%s5 + $0x70] sm:$0xff]
        %v391 = vld [vmem:[%s5 + $0x78] sm:$0xff]
        %v392 = vld [vmem:[%s6] sm:$0x1]
        %v394 = vlaneseq
        %v395 = vshrl.u32 %v394, 7
        %v396 = vsub.s32 0, %v395
        %v397 = vrot.slane %v392, %v396
        %399 = vmatprep.subr.mxu0 0.0
        %400 = vmatpush1.msra.mxu0 %v391
        %401 = vmatprep.subr.mxu0 0.0
        %402 = vmatpush1.msra.mxu0 %v390
        %403 = vmatprep.subr.mxu0 0.0
        %404 = vmatpush1.msra.mxu0 %v389
        %405 = vmatprep.subr.mxu0 0.0
        %406 = vmatpush1.msra.mxu0 %v388
        %407 = vmatprep.subr.mxu0 0.0
        %408 = vmatpush1.msra.mxu0 %v387
        %409 = vmatprep.subr.mxu0 0.0
        %410 = vmatpush1.msra.mxu0 %v386
        %411 = vmatprep.subr.mxu0 0.0
        %412 = vmatpush1.msra.mxu0 %v385
        %413 = vmatprep.subr.mxu0 0.0
        %414 = vmatpush1.msra.mxu0 %v384
        %415 = vmatprep.subr.mxu0 0.0
        %416 = vmatpush1.msra.mxu0 %v383
        %417 = vmatprep.subr.mxu0 0.0
        %418 = vmatpush1.msra.mxu0 %v382
        %419 = vmatprep.subr.mxu0 0.0
        %420 = vmatpush1.msra.mxu0 %v381
        %421 = vmatprep.subr.mxu0 0.0
        %422 = vmatpush1.msra.mxu0 %v380
        %423 = vmatprep.subr.mxu0 0.0
        %424 = vmatpush1.msra.mxu0 %v379
        %425 = vmatprep.subr.mxu0 0.0
        %426 = vmatpush1.msra.mxu0 %v378
        %427 = vmatprep.subr.mxu0 0.0
        %428 = vmatpush1.msra.mxu0 %v377
        %429 = vmatprep.subr.mxu0 0.0
        %430 = vmatpush1.msra.mxu0 %v376
        %431 = vmatprep.subr.mxu0 0.0
        %432 = vmatpush2.msra.mxu0 0.0
        %433 = vmatprep.subr.mxu0 0.0
        %434 = vmatpush2.msra.mxu0 0.0
        %435 = vmatprep.subr.mxu0 0.0
        %436 = vmatpush2.msra.mxu0 0.0
        %437 = vmatprep.subr.mxu0 0.0
        %438 = vmatpush2.msra.mxu0 0.0
        %439 = vmatprep.subr.mxu0 0.0
        %440 = vmatpush2.msra.mxu0 0.0
        %441 = vmatprep.subr.mxu0 0.0
        %442 = vmatpush2.msra.mxu0 0.0
        %443 = vmatprep.subr.mxu0 0.0
        %444 = vmatpush2.msra.mxu0 0.0
        %445 = vmatprep.subr.mxu0 0.0
        %446 = vmatpush2.msra.mxu0 0.0
        %447 = vmatprep.subr.mxu0 0.0
        %448 = vmatpush2.msra.mxu0 0.0
        %449 = vmatprep.subr.mxu0 0.0
        %450 = vmatpush2.msra.mxu0 0.0
        %451 = vmatprep.subr.mxu0 0.0
        %452 = vmatpush2.msra.mxu0 0.0
        %453 = vmatprep.subr.mxu0 0.0
        %454 = vmatpush2.msra.mxu0 0.0
        %455 = vmatprep.subr.mxu0 0.0
        %456 = vmatpush2.msra.mxu0 0.0
        %457 = vmatprep.subr.mxu0 0.0
        %458 = vmatpush2.msra.mxu0 0.0
        %459 = vmatprep.subr.mxu0 0.0
        %460 = vmatpush2.msra.mxu0 0.0
        %461 = vmatprep.subr.mxu0 0.0
        %462 = vmatpush2.msra.mxu0 0.0
        %463 = vmatprep.mubr.f32.mxu0 0.0
        %464 = vmatmul.mubr.f32.gmra.mxu0 %v374
        %v465 = vpop.f32.mrf.mxu0
        %v466 = vadd.f32 %v397, %v465
        %v467 = vpop.f32.mrf.mxu0
        %468 = vdwg.mxu0
        %v469 = vtanh.pop %v466
        %v470 = vsub.f32 %v374, %v469
        %472 = vset.pattern.permute.xlu0 0
        %473 = vperm.xlu0 %472, %v375
        %v474 = vpop.permute.xlu0 %473
        %v476 = vmul.f32 %v469, %v474
        %v477 = vadd.f32 %v470, %v476
        %v478 = vld [vmem:[%s315] sm:$0xff]
        %v479 = vld [vmem:[%s315 + $0x8] sm:$0xff]
        %v480 = vld [vmem:[%s315 + $0x10] sm:$0xff]
        %v481 = vld [vmem:[%s315 + $0x18] sm:$0xff]
        %v482 = vld [vmem:[#allocation7] sm:$0xff]
        %v483 = vld [vmem:[#allocation7 + $0x8] sm:$0xff]
        %v484 = vld [vmem:[#allocation7 + $0x10] sm:$0xff]
        %v485 = vld [vmem:[#allocation7 + $0x18] sm:$0xff]
        %v486 = vld [vmem:[#allocation7 + $0x20] sm:$0xff]
        %v487 = vld [vmem:[#allocation7 + $0x28] sm:$0xff]
        %v488 = vld [vmem:[#allocation7 + $0x30] sm:$0xff]
        %v489 = vld [vmem:[#allocation7 + $0x38] sm:$0xff]
        %v490 = vld [vmem:[#allocation7 + $0x40] sm:$0xff]
        %v491 = vld [vmem:[#allocation7 + $0x48] sm:$0xff]
        %v492 = vld [vmem:[#allocation7 + $0x50] sm:$0xff]
        %v493 = vld [vmem:[#allocation7 + $0x58] sm:$0xff]
        %v494 = vld [vmem:[#allocation7 + $0x60] sm:$0xff]
        %v495 = vld [vmem:[#allocation7 + $0x68] sm:$0xff]
        %v496 = vld [vmem:[#allocation7 + $0x70] sm:$0xff]
        %v497 = vld [vmem:[#allocation7 + $0x78] sm:$0xff]
        %v498 = vld [vmem:[#allocation7 + $0x80] sm:$0xff]
        %v499 = vld [vmem:[#allocation7 + $0x88] sm:$0xff]
        %v500 = vld [vmem:[#allocation7 + $0x90] sm:$0xff]
        %v501 = vld [vmem:[#allocation7 + $0x98] sm:$0xff]
        %v502 = vld [vmem:[#allocation7 + $0xa0] sm:$0xff]
        %v503 = vld [vmem:[#allocation7 + $0xa8] sm:$0xff]
        %v504 = vld [vmem:[#allocation7 + $0xb0] sm:$0xff]
        %v505 = vld [vmem:[#allocation7 + $0xb8] sm:$0xff]
        %v506 = vld [vmem:[#allocation7 + $0xc0] sm:$0xff]
        %v507 = vld [vmem:[#allocation7 + $0xc8] sm:$0xff]
        %v508 = vld [vmem:[#allocation7 + $0xd0] sm:$0xff]
        %v509 = vld [vmem:[#allocation7 + $0xd8] sm:$0xff]
        %v510 = vld [vmem:[#allocation7 + $0xe0] sm:$0xff]
        %v511 = vld [vmem:[#allocation7 + $0xe8] sm:$0xff]
        %v512 = vld [vmem:[#allocation7 + $0xf0] sm:$0xff]
        %v513 = vld [vmem:[#allocation7 + $0xf8] sm:$0xff]
        %v514 = vld [vmem:[#allocation7 + $0x100] sm:$0xff]
        %v515 = vld [vmem:[#allocation7 + $0x108] sm:$0xff]
        %v516 = vld [vmem:[#allocation7 + $0x110] sm:$0xff]
        %v517 = vld [vmem:[#allocation7 + $0x118] sm:$0xff]
        %v518 = vld [vmem:[#allocation7 + $0x120] sm:$0xff]
        %v519 = vld [vmem:[#allocation7 + $0x128] sm:$0xff]
        %v520 = vld [vmem:[#allocation7 + $0x130] sm:$0xff]
        %v521 = vld [vmem:[#allocation7 + $0x138] sm:$0xff]
        %v522 = vld [vmem:[#allocation7 + $0x140] sm:$0xff]
        %v523 = vld [vmem:[#allocation7 + $0x148] sm:$0xff]
        %v524 = vld [vmem:[#allocation7 + $0x150] sm:$0xff]
        %v525 = vld [vmem:[#allocation7 + $0x158] sm:$0xff]
        %v526 = vld [vmem:[#allocation7 + $0x160] sm:$0xff]
        %v527 = vld [vmem:[#allocation7 + $0x168] sm:$0xff]
        %v528 = vld [vmem:[#allocation7 + $0x170] sm:$0xff]
        %v529 = vld [vmem:[#allocation7 + $0x178] sm:$0xff]
        %v530 = vld [vmem:[#allocation7 + $0x180] sm:$0xff]
        %v531 = vld [vmem:[#allocation7 + $0x188] sm:$0xff]
        %v532 = vld [vmem:[#allocation7 + $0x190] sm:$0xff]
        %v533 = vld [vmem:[#allocation7 + $0x198] sm:$0xff]
        %v534 = vld [vmem:[#allocation7 + $0x1a0] sm:$0xff]
        %v535 = vld [vmem:[#allocation7 + $0x1a8] sm:$0xff]
        %v536 = vld [vmem:[#allocation7 + $0x1b0] sm:$0xff]
        %v537 = vld [vmem:[#allocation7 + $0x1b8] sm:$0xff]
        %v538 = vld [vmem:[#allocation7 + $0x1c0] sm:$0xff]
        %v539 = vld [vmem:[#allocation7 + $0x1c8] sm:$0xff]
        %v540 = vld [vmem:[#allocation7 + $0x1d0] sm:$0xff]
        %v541 = vld [vmem:[#allocation7 + $0x1d8] sm:$0xff]
        %v542 = vld [vmem:[#allocation7 + $0x1e0] sm:$0xff]
        %v543 = vld [vmem:[#allocation7 + $0x1e8] sm:$0xff]
        %v544 = vld [vmem:[#allocation7 + $0x1f0] sm:$0xff]
        %v545 = vld [vmem:[#allocation7 + $0x1f8] sm:$0xff]
        %546 = vmatprep.subr.mxu0 %v543
        %547 = vmatpush1.msra.mxu0 %v542
        %548 = vmatprep.subr.mxu0 %v539
        %549 = vmatpush1.msra.mxu0 %v538
        %550 = vmatprep.subr.mxu0 %v535
        %551 = vmatpush1.msra.mxu0 %v534
        %552 = vmatprep.subr.mxu0 %v531
        %553 = vmatpush1.msra.mxu0 %v530
        %554 = vmatprep.subr.mxu0 %v527
        %555 = vmatpush1.msra.mxu0 %v526
        %556 = vmatprep.subr.mxu0 %v523
        %557 = vmatpush1.msra.mxu0 %v522
        %558 = vmatprep.subr.mxu0 %v519
        %559 = vmatpush1.msra.mxu0 %v518
        %560 = vmatprep.subr.mxu0 %v515
        %561 = vmatpush1.msra.mxu0 %v514
        %562 = vmatprep.subr.mxu0 %v511
        %563 = vmatpush1.msra.mxu0 %v510
        %564 = vmatprep.subr.mxu0 %v507
        %565 = vmatpush1.msra.mxu0 %v506
        %566 = vmatprep.subr.mxu0 %v503
        %567 = vmatpush1.msra.mxu0 %v502
        %568 = vmatprep.subr.mxu0 %v499
        %569 = vmatpush1.msra.mxu0 %v498
        %570 = vmatprep.subr.mxu0 %v495
        %571 = vmatpush1.msra.mxu0 %v494
        %572 = vmatprep.subr.mxu0 %v491
        %573 = vmatpush1.msra.mxu0 %v490
        %574 = vmatprep.subr.mxu0 %v487
        %575 = vmatpush1.msra.mxu0 %v486
        %576 = vmatprep.subr.mxu0 %v483
        %577 = vmatpush1.msra.mxu0 %v482
        %578 = vmatprep.subr.mxu0 0.0
        %579 = vmatpush2.msra.mxu0 0.0
        %580 = vmatprep.subr.mxu0 0.0
        %581 = vmatpush2.msra.mxu0 0.0
        %582 = vmatprep.subr.mxu0 0.0
        %583 = vmatpush2.msra.mxu0 0.0
        %584 = vmatprep.subr.mxu0 0.0
        %585 = vmatpush2.msra.mxu0 0.0
        %586 = vmatprep.subr.mxu0 0.0
        %587 = vmatpush2.msra.mxu0 0.0
        %588 = vmatprep.subr.mxu0 0.0
        %589 = vmatpush2.msra.mxu0 0.0
        %590 = vmatprep.subr.mxu0 0.0
        %591 = vmatpush2.msra.mxu0 0.0
        %592 = vmatprep.subr.mxu0 0.0
        %593 = vmatpush2.msra.mxu0 0.0
        %594 = vmatprep.subr.mxu0 0.0
        %595 = vmatpush2.msra.mxu0 0.0
        %596 = vmatprep.subr.mxu0 0.0
        %597 = vmatpush2.msra.mxu0 0.0
        %598 = vmatprep.subr.mxu0 0.0
        %599 = vmatpush2.msra.mxu0 0.0
        %600 = vmatprep.subr.mxu0 0.0
        %601 = vmatpush2.msra.mxu0 0.0
        %602 = vmatprep.subr.mxu0 0.0
        %603 = vmatpush2.msra.mxu0 0.0
        %604 = vmatprep.subr.mxu0 0.0
        %605 = vmatpush2.msra.mxu0 0.0
        %606 = vmatprep.subr.mxu0 0.0
        %607 = vmatpush2.msra.mxu0 0.0
        %608 = vmatprep.subr.mxu0 0.0
        %609 = vmatpush2.msra.mxu0 0.0
        %610 = vmatprep.mubr.f32.mxu0 0.0
        %611 = vmatmul.mubr.f32.gmra.mxu0 %v373
        %v612 = vpop.f32.mrf.mxu0
        %v613 = vadd.f32 0.0, %v612
        %v614 = vpop.f32.mrf.mxu0
        %v615 = vadd.f32 0.0, %v614
        %616 = vdwg.mxu0
        %617 = vmatprep.subr.mxu0 %v545
        %618 = vmatpush1.msra.mxu0 %v544
        %619 = vmatprep.subr.mxu0 %v541
        %620 = vmatpush1.msra.mxu0 %v540
        %621 = vmatprep.subr.mxu0 %v537
        %622 = vmatpush1.msra.mxu0 %v536
        %623 = vmatprep.subr.mxu0 %v533
        %624 = vmatpush1.msra.mxu0 %v532
        %625 = vmatprep.subr.mxu0 %v529
        %626 = vmatpush1.msra.mxu0 %v528
        %627 = vmatprep.subr.mxu0 %v525
        %628 = vmatpush1.msra.mxu0 %v524
        %629 = vmatprep.subr.mxu0 %v521
        %630 = vmatpush1.msra.mxu0 %v520
        %631 = vmatprep.subr.mxu0 %v517
        %632 = vmatpush1.msra.mxu0 %v516
        %633 = vmatprep.subr.mxu0 %v513
        %634 = vmatpush1.msra.mxu0 %v512
        %635 = vmatprep.subr.mxu0 %v509
        %636 = vmatpush1.msra.mxu0 %v508
        %637 = vmatprep.subr.mxu0 %v505
        %638 = vmatpush1.msra.mxu0 %v504
        %639 = vmatprep.subr.mxu0 %v501
        %640 = vmatpush1.msra.mxu0 %v500
        %641 = vmatprep.subr.mxu0 %v497
        %642 = vmatpush1.msra.mxu0 %v496
        %643 = vmatprep.subr.mxu0 %v493
        %644 = vmatpush1.msra.mxu0 %v492
        %645 = vmatprep.subr.mxu0 %v489
        %646 = vmatpush1.msra.mxu0 %v488
        %647 = vmatprep.subr.mxu0 %v485
        %648 = vmatpush1.msra.mxu0 %v484
        %649 = vmatprep.subr.mxu0 0.0
        %650 = vmatpush2.msra.mxu0 0.0
        %651 = vmatprep.subr.mxu0 0.0
        %652 = vmatpush2.msra.mxu0 0.0
        %653 = vmatprep.subr.mxu0 0.0
        %654 = vmatpush2.msra.mxu0 0.0
        %655 = vmatprep.subr.mxu0 0.0
        %656 = vmatpush2.msra.mxu0 0.0
        %657 = vmatprep.subr.mxu0 0.0
        %658 = vmatpush2.msra.mxu0 0.0
        %659 = vmatprep.subr.mxu0 0.0
        %660 = vmatpush2.msra.mxu0 0.0
        %661 = vmatprep.subr.mxu0 0.0
        %662 = vmatpush2.msra.mxu0 0.0
        %663 = vmatprep.subr.mxu0 0.0
        %664 = vmatpush2.msra.mxu0 0.0
        %665 = vmatprep.subr.mxu0 0.0
        %666 = vmatpush2.msra.mxu0 0.0
        %667 = vmatprep.subr.mxu0 0.0
        %668 = vmatpush2.msra.mxu0 0.0
        %669 = vmatprep.subr.mxu0 0.0
        %670 = vmatpush2.msra.mxu0 0.0
        %671 = vmatprep.subr.mxu0 0.0
        %672 = vmatpush2.msra.mxu0 0.0
        %673 = vmatprep.subr.mxu0 0.0
        %674 = vmatpush2.msra.mxu0 0.0
        %675 = vmatprep.subr.mxu0 0.0
        %676 = vmatpush2.msra.mxu0 0.0
        %677 = vmatprep.subr.mxu0 0.0
        %678 = vmatpush2.msra.mxu0 0.0
        %679 = vmatprep.subr.mxu0 0.0
        %680 = vmatpush2.msra.mxu0 0.0
        %681 = vmatprep.mubr.f32.mxu0 0.0
        %682 = vmatmul.mubr.f32.gmra.mxu0 %v373
        %v683 = vpop.f32.mrf.mxu0
        %v684 = vadd.f32 0.0, %v683
        %v685 = vpop.f32.mrf.mxu0
        %v686 = vadd.f32 0.0, %v685
        %687 = vdwg.mxu0
        %v688 = vadd.f32 %v478, %v613
        %v689 = vadd.f32 %v479, %v615
        %v690 = vadd.f32 %v480, %v684
        %v691 = vadd.f32 %v481, %v686
        %v692 = vxor.u32 %v688, 2147483648
        %v693 = vmul.f32 %v692, 1.442695
        %v694 = vpow.pop %v693
        %v695 = vadd.f32 %v694, 1.0
        %v696 = vrcp.pop %v695
        %v697 = vmul.f32 1.0, %v696
        %v698 = vxor.u32 %v689, 2147483648
        %v699 = vmul.f32 %v698, 1.442695
        %v700 = vpow.pop %v699
        %v701 = vadd.f32 %v700, 1.0
        %v702 = vrcp.pop %v701
        %v703 = vmul.f32 1.0, %v702
        %v704 = vxor.u32 %v690, 2147483648
        %v705 = vmul.f32 %v704, 1.442695
        %v706 = vpow.pop %v705
        %v707 = vadd.f32 %v706, 1.0
        %v708 = vrcp.pop %v707
        %v709 = vmul.f32 1.0, %v708
        %v710 = vtanh.pop %v691
        %v711 = vmul.f32 %v697, %v477
        %v712 = vmul.f32 %v703, %v710
        %v713 = vadd.f32 %v711, %v712
        %v714 = vtanh.pop %v713
        %v715 = vmul.f32 %v709, %v714
        %716 = vst [vmem:[#allocation2] sm:$0xff] %v715
        %717 = vst [vmem:[#allocation3] sm:$0xff] %v713
        %718 = vst [vmem:[%s353] sm:$0xff] %v715
        %719 = vst [vmem:[%s360] sm:$0xff] %v713
        %s720 = sand.u32 %s195, 1
        %s721 = scalar_lea.sflag [#allocation6], %s720
        %s722 = sand.u32 %s195, 1
        %s723 = smul.addr %s722, 8
        %s724 = scalar_lea.vmem [#allocation9], %s723
        %s725 = sand.u32 %s221, 1
        %s726 = scalar_lea.sflag [#allocation11], %s725
        %s727 = sand.u32 %s221, 1
        %s728 = smul.addr %s727, 8
        %s729 = scalar_lea.vmem [#allocation10], %s728
        // Predicated region
        $region61: #{tpu_custom_call.1} parent=47 // pred_check
          %p730 = pneg %p205
        $region62: #{tpu_custom_call.1} parent=47 // pred_check_branch
          %732 = sbr.rel (%p730) target = $region64
        $region63: #{tpu_custom_call.1} parent=47 // pred_region
          %s734 = ssub.s32 128, 128
          %735 = vsyncadd %s721, %s734
          %s736 = smul.addr %s30, 128
          %s737 = scalar_lea.hbm %s7, %s736
          %s739 = sshll.u32 %s724, 4
          %s740 = int_to_ptr.vmem [resolvable:$true] %s739
          %742 = dma.vmem_to_hbm [thread:$0]  %s740, 128, %s737, %s721
        $region64: #{tpu_custom_call.1} parent=47 // pred_fallthru
          _
        // Predicated region
        $region65: #{tpu_custom_call.1} parent=47 // pred_check
          %p743 = pneg %p231
        $region66: #{tpu_custom_call.1} parent=47 // pred_check_branch
          %745 = sbr.rel (%p743) target = $region68
        $region67: #{tpu_custom_call.1} parent=47 // pred_region
          %s747 = ssub.s32 128, 128
          %748 = vsyncadd %s726, %s747
          %s749 = smul.addr %s30, 128
          %s750 = scalar_lea.hbm %s8, %s749
          %s752 = sshll.u32 %s729, 4
          %s753 = int_to_ptr.vmem [resolvable:$true] %s752
          %755 = dma.vmem_to_hbm [thread:$0]  %s753, 128, %s750, %s726
        $region68: #{tpu_custom_call.1} parent=47 // pred_fallthru
          _
      $region48: #{tpu_custom_call.1} parent=5 // pred_fallthru
        _
      %p756 = scmp.le.s32.totalorder 2, %s25
      // Predicated region
      $region69: #{tpu_custom_call.1} parent=5 // pred_check
        %p757 = pneg %p756
      $region70: #{tpu_custom_call.1} parent=5 // pred_check_branch
        %759 = sbr.rel (%p757) target = $region72
      $region71: #{tpu_custom_call.1} parent=5 // pred_region
        %s760 = ssub.s32 %s25, 2
        // Predicated region
        $region73: #{tpu_custom_call.1} parent=71 // pred_check
          %p761 = pneg %p211
        $region74: #{tpu_custom_call.1} parent=71 // pred_check_branch
          %763 = sbr.rel (%p761) target = $region76
        $region75: #{tpu_custom_call.1} parent=71 // pred_region
          %s764 = sand.u32 %s196, 1
          %s765 = scalar_lea.sflag [#allocation6], %s764
          %s766 = sand.u32 %s196, 1
          %s767 = smul.addr %s766, 8
          %s768 = scalar_lea.vmem [#allocation9], %s767
          %769 = dma.done %s765, 128
        $region76: #{tpu_custom_call.1} parent=71 // pred_fallthru
          _
        // Predicated region
        $region77: #{tpu_custom_call.1} parent=71 // pred_check
          %p770 = pneg %p237
        $region78: #{tpu_custom_call.1} parent=71 // pred_check_branch
          %772 = sbr.rel (%p770) target = $region80
        $region79: #{tpu_custom_call.1} parent=71 // pred_region
          %s773 = sand.u32 %s222, 1
          %s774 = scalar_lea.sflag [#allocation11], %s773
          %s775 = sand.u32 %s222, 1
          %s776 = smul.addr %s775, 8
          %s777 = scalar_lea.vmem [#allocation10], %s776
          %778 = dma.done %s774, 128
        $region80: #{tpu_custom_call.1} parent=71 // pred_fallthru
          _
      $region72: #{tpu_custom_call.1} parent=5 // pred_fallthru
        _
    $region6: #{tpu_custom_call.1} parent=1 // loop_footer
      %s29 = sadd.s32 1, %s25
    $region7: #{tpu_custom_call.1} parent=1 // loop_footer_branch
      %24 = sbr.rel target = $region3
    $region8: #{tpu_custom_call.1} parent=1 // loop_exit
      _
    %779 = vsyncpa [#allocation5], 1
    %s780 = scalar_lea.sflag [#allocation5], 1
    %781 = vsyncpa %s780, 1
    %782 = vsyncpa [#allocation8], 1
    %783 = vsyncpa [#allocation6], 1
    %s784 = scalar_lea.sflag [#allocation6], 1
    %785 = vsyncpa %s784, 1
    %786 = vsyncpa [#allocation11], 1
    %s787 = scalar_lea.sflag [#allocation11], 1
    %788 = vsyncpa %s787, 1

</llo_original>
